<compile_context>
chip_gen: v7x
topology: tpu7x:2x2x1
jax: 0.10.0
libtpu: 0.0.40
codegen_flags: <defaults>
</compile_context>

<pallas_src>
import functools

import jax
import jax.numpy as jnp
from jax.experimental import pallas as pl
from jax.experimental.pallas import tpu as pltpu


def _embed_kernel_mark(x_ref, xm_ref, w_ref, b_ref, o_ref, *, tb):
    # x_ref: (TB, L, N); xm_ref: (TB, L, M); w_ref: (L, TD) compute dtype;
    # b_ref: (1, TD) f32; o_ref: (TB, V, TD)
    w = w_ref[...]
    bias = b_ref[...]                          # f32 epilogue add
    dn = (((0,), (0,)), ((), ()))              # contract L on both -> fused permute
    for i in range(tb):                        # static unroll over the batch block
        xv = jnp.concatenate([x_ref[i], xm_ref[i]], axis=-1)      # (L, V)
        acc = jax.lax.dot_general(xv.astype(w.dtype), w, dn,
                                  preferred_element_type=jnp.float32)
        o_ref[i] = (acc + bias).astype(o_ref.dtype)


def _embed_kernel_nomark(x_ref, w_ref, b_ref, o_ref, *, tb):
    w = w_ref[...]
    bias = b_ref[...]
    dn = (((0,), (0,)), ((), ()))
    for i in range(tb):
        acc = jax.lax.dot_general(x_ref[i].astype(w.dtype), w, dn,
                                  preferred_element_type=jnp.float32)
        o_ref[i] = (acc + bias).astype(o_ref.dtype)


def _choose_tb(B):
    # Prefer >=2 batch grid steps (so v7x's 2 TCs both get work) while still
    # packing several batches per step to amortize per-step overhead.
    for t in (8, 4, 2):
        if B % t == 0 and B // t >= 2:
            return t
    return 1


def _choose_tile_d(L, D, V, TB, x_bytes, w_bytes, o_bytes, budget_bytes):
    def fits(td):
        vmem = (2 * L * td * w_bytes            # double-buffered weight tile
                + 2 * td * 4                    # bias (f32)
                + 2 * TB * L * V * x_bytes      # x (+ x_mark) tiles
                + 2 * TB * V * td * o_bytes)    # output tile
        return vmem <= budget_bytes

    if fits(D):
        return D                                # whole weight resident -> single HBM fetch
    for cand in (2048, 1024, 512, 256, 128):
        if D % cand == 0 and fits(cand):
            return cand
    return D                                    # rare fallback; VMEM limit governs


def data_embedding_inverted(x, x_mark, weight, bias, *,
                            compute_dtype=jnp.bfloat16, out_dtype=None):
    """x: [B, L, N]; x_mark: [B, L, M] or None; weight: [D, L] (torch layout); bias: [D]."""
    B, L, N = x.shape
    D = weight.shape[0]
    has_mark = x_mark is not None
    M = x_mark.shape[2] if has_mark else 0
    V = N + M
    out_dtype = x.dtype if out_dtype is None else out_dtype

    # One-time param glue: transpose to [L, D] and store in the MXU-native compute
    # dtype (bf16 by default); bias kept f32 for the epilogue.
    w_t = jnp.transpose(weight).astype(compute_dtype)      # [L, D]
    b2d = bias.reshape(1, D).astype(jnp.float32)            # [1, D]

    x_bytes = jnp.dtype(x.dtype).itemsize
    w_bytes = jnp.dtype(compute_dtype).itemsize
    o_bytes = jnp.dtype(out_dtype).itemsize

    TB = _choose_tb(B)
    nb = B // TB
    budget = 36 * 1024 * 1024          # keep headroom under the 48 MiB VMEM limit (v7x-safe)
    tile_d = _choose_tile_d(L, D, V, TB, x_bytes, w_bytes, o_bytes, budget)
    nd = pl.cdiv(D, tile_d)

    # d tiles OUTERMOST, batch blocks innermost -> weight/bias block index constant
    # along the innermost axis => each weight tile DMA'd once (once total when nd==1).
    grid = (nd, nb)

    x_spec = pl.BlockSpec((TB, L, N), lambda d, b: (b, 0, 0))
    w_spec = pl.BlockSpec((L, tile_d), lambda d, b: (0, d))
    b_spec = pl.BlockSpec((1, tile_d), lambda d, b: (0, d))
    o_spec = pl.BlockSpec((TB, V, tile_d), lambda d, b: (b, 0, d))

    if has_mark:
        xm_spec = pl.BlockSpec((TB, L, M), lambda d, b: (b, 0, 0))
        kernel = functools.partial(_embed_kernel_mark, tb=TB)
        in_specs = [x_spec, xm_spec, w_spec, b_spec]
        operands = (x, x_mark, w_t, b2d)
    else:
        kernel = functools.partial(_embed_kernel_nomark, tb=TB)
        in_specs = [x_spec, w_spec, b_spec]
        operands = (x, w_t, b2d)

    out = pl.pallas_call(
        kernel,
        out_shape=jax.ShapeDtypeStruct((B, V, D), out_dtype),
        grid_spec=pltpu.PrefetchScalarGridSpec(
            num_scalar_prefetch=0,
            grid=grid,
            in_specs=in_specs,
            out_specs=o_spec,
        ),
        compiler_params=pltpu.CompilerParams(
            # d axis "arbitrary" so megacore sharding happens along the batch axis
            # (preserves per-core weight residency); batch axis "parallel" for v7x.
            dimension_semantics=("arbitrary", "parallel"),
            vmem_limit_bytes=48 * 1024 * 1024,
        ),
    )(*operands)

    # TODO(synk): dropout omitted (eval-mode identity); training-mode dropout would
    # use pltpu.prng_seed + pltpu.prng_random_bits inside the kernel.
    return out


if __name__ == "__main__":
    key = jax.random.PRNGKey(0)
    B, L, N, M, D = 4, 8, 4, 4, 32   # seq_len L == c_in of the Linear

    k_x, k_m, k_w, k_b = jax.random.split(key, 4)
    x = jax.random.normal(k_x, (B, L, N), dtype=jnp.float32)
    x_mark = jax.random.normal(k_m, (B, L, M), dtype=jnp.float32)

    # Deterministic params mimicking nn.Linear init: U(-1/sqrt(c_in), 1/sqrt(c_in))
    bound = 1.0 / (L ** 0.5)
    weight = jax.random.uniform(k_w, (D, L), minval=-bound, maxval=bound,
                                dtype=jnp.float32)   # torch layout [out_features, in_features]
    bias = jax.random.uniform(k_b, (D,), minval=-bound, maxval=bound,
                              dtype=jnp.float32)

    out = jax.block_until_ready(data_embedding_inverted(x, x_mark, weight, bias))

    # Pure-JAX reference mirroring the kernel's numerics (bf16 inputs, f32 accumulation).
    xc = jnp.concatenate(
        [jnp.transpose(x, (0, 2, 1)), jnp.transpose(x_mark, (0, 2, 1))], axis=1)
    ref = jnp.einsum("bvl,dl->bvd",
                     xc.astype(jnp.bfloat16), weight.astype(jnp.bfloat16),
                     preferred_element_type=jnp.float32) + bias
    assert out.shape == (B, N + M, D)
    assert jnp.allclose(out, ref.astype(out.dtype), atol=1e-4, rtol=1e-4), (
        float(jnp.max(jnp.abs(out - ref.astype(out.dtype)))))

    # Also exercise the x_mark=None branch.
    out2 = jax.block_until_ready(data_embedding_inverted(x, None, weight, bias))
    ref2 = jnp.einsum("bvl,dl->bvd",
                      jnp.transpose(x, (0, 2, 1)).astype(jnp.bfloat16),
                      weight.astype(jnp.bfloat16),
                      preferred_element_type=jnp.float32) + bias
    assert out2.shape == (B, N, D)
    assert jnp.allclose(out2, ref2.astype(out2.dtype), atol=1e-4, rtol=1e-4)

    print("KERNEL_OK")
</pallas_src>

<mosaic_0001>
module attributes {stable_mosaic.version = 11 : i64} {
  func.func @_embed_kernel_mark(%arg0: i32, %arg1: i32, %arg2: memref<2x8x4xf32, #tpu.memory_space<vmem>>, %arg3: memref<2x8x4xf32, #tpu.memory_space<vmem>>, %arg4: memref<8x32xbf16, #tpu.memory_space<vmem>>, %arg5: memref<1x32xf32, #tpu.memory_space<vmem>>, %arg6: memref<2x8x32xf32, #tpu.memory_space<vmem>>) attributes {dimension_semantics = [#tpu.dimension_semantics<arbitrary>, #tpu.dimension_semantics<parallel>], iteration_bounds = array<i64: 1, 2>, scalar_prefetch = 0 : i64, scratch_operands = 0 : i64, tpu.core_type = #tpu.core_type<tc>, window_params = [{transform_indices = @transform_0, window_bounds = array<i64: 2, 8, 4>}, {transform_indices = @transform_1, window_bounds = array<i64: 2, 8, 4>}, {transform_indices = @transform_2, window_bounds = array<i64: 8, 32>}, {transform_indices = @transform_3, window_bounds = array<i64: 1, 32>}, {transform_indices = @transform_4, window_bounds = array<i64: 2, 8, 32>}]} {
    %c0 = arith.constant 0 : index
    %c0_0 = arith.constant 0 : index
    %0 = vector.load %arg4[%c0, %c0_0] : memref<8x32xbf16, #tpu.memory_space<vmem>>, vector<8x32xbf16>
    %c0_1 = arith.constant 0 : index
    %c0_2 = arith.constant 0 : index
    %1 = vector.load %arg5[%c0_1, %c0_2] : memref<1x32xf32, #tpu.memory_space<vmem>>, vector<1x32xf32>
    %c0_3 = arith.constant 0 : index
    %c0_4 = arith.constant 0 : index
    %c0_5 = arith.constant 0 : index
    %2 = vector.load %arg2[%c0_3, %c0_4, %c0_5] : memref<2x8x4xf32, #tpu.memory_space<vmem>>, vector<1x8x4xf32>
    %3 = vector.shape_cast %2 : vector<1x8x4xf32> to vector<8x4xf32>
    %c0_6 = arith.constant 0 : index
    %c0_7 = arith.constant 0 : index
    %c0_8 = arith.constant 0 : index
    %4 = vector.load %arg3[%c0_6, %c0_7, %c0_8] : memref<2x8x4xf32, #tpu.memory_space<vmem>>, vector<1x8x4xf32>
    %5 = vector.shape_cast %4 : vector<1x8x4xf32> to vector<8x4xf32>
    %6 = tpu.concatenate %3, %5 in 1 : vector<8x4xf32>, vector<8x4xf32> -> vector<8x8xf32>
    %7 = arith.truncf %6 : vector<8x8xf32> to vector<8x8xbf16>
    %cst = arith.constant dense<0.000000e+00> : vector<8x32xf32>
    %8 = tpu.matmul %7, %0, %cst {dimension_numbers = #tpu.dot_dimension_numbers<[0], [0], [1], [1], [0, 1, 1, 1], [], []>} : vector<8x8xbf16>, vector<8x32xbf16>, vector<8x32xf32> -> vector<8x32xf32>
    %9 = vector.broadcast %1 : vector<1x32xf32> to vector<8x32xf32>
    %10 = arith.addf %8, %9 : vector<8x32xf32>
    %c0_9 = arith.constant 0 : index
    %c0_10 = arith.constant 0 : index
    %c0_11 = arith.constant 0 : index
    %11 = vector.load %arg6[%c0_9, %c0_10, %c0_11] : memref<2x8x32xf32, #tpu.memory_space<vmem>>, vector<1x8x32xf32>
    %12 = vector.shape_cast %11 : vector<1x8x32xf32> to vector<8x32xf32>
    %13 = vector.shape_cast %10 : vector<8x32xf32> to vector<1x8x32xf32>
    tpu.vector_store %arg6[%c0_9, %c0_10, %c0_11], %13 {strides = array<i32>} : memref<2x8x32xf32, #tpu.memory_space<vmem>>, vector<1x8x32xf32>,
    %c1 = arith.constant 1 : index
    %c0_12 = arith.constant 0 : index
    %c0_13 = arith.constant 0 : index
    %14 = vector.load %arg2[%c1, %c0_12, %c0_13] : memref<2x8x4xf32, #tpu.memory_space<vmem>>, vector<1x8x4xf32>
    %15 = vector.shape_cast %14 : vector<1x8x4xf32> to vector<8x4xf32>
    %c1_14 = arith.constant 1 : index
    %c0_15 = arith.constant 0 : index
    %c0_16 = arith.constant 0 : index
    %16 = vector.load %arg3[%c1_14, %c0_15, %c0_16] : memref<2x8x4xf32, #tpu.memory_space<vmem>>, vector<1x8x4xf32>
    %17 = vector.shape_cast %16 : vector<1x8x4xf32> to vector<8x4xf32>
    %18 = tpu.concatenate %15, %17 in 1 : vector<8x4xf32>, vector<8x4xf32> -> vector<8x8xf32>
    %19 = arith.truncf %18 : vector<8x8xf32> to vector<8x8xbf16>
    %cst_17 = arith.constant dense<0.000000e+00> : vector<8x32xf32>
    %20 = tpu.matmul %19, %0, %cst_17 {dimension_numbers = #tpu.dot_dimension_numbers<[0], [0], [1], [1], [0, 1, 1, 1], [], []>} : vector<8x8xbf16>, vector<8x32xbf16>, vector<8x32xf32> -> vector<8x32xf32>
    %21 = vector.broadcast %1 : vector<1x32xf32> to vector<8x32xf32>
    %22 = arith.addf %20, %21 : vector<8x32xf32>
    %c1_18 = arith.constant 1 : index
    %c0_19 = arith.constant 0 : index
    %c0_20 = arith.constant 0 : index
    %23 = vector.load %arg6[%c1_18, %c0_19, %c0_20] : memref<2x8x32xf32, #tpu.memory_space<vmem>>, vector<1x8x32xf32>
    %24 = vector.shape_cast %23 : vector<1x8x32xf32> to vector<8x32xf32>
    %25 = vector.shape_cast %22 : vector<8x32xf32> to vector<1x8x32xf32>
    tpu.vector_store %arg6[%c1_18, %c0_19, %c0_20], %25 {strides = array<i32>} : memref<2x8x32xf32, #tpu.memory_space<vmem>>, vector<1x8x32xf32>,
    return
  }
  func.func @transform_0(%arg0: i32, %arg1: i32) -> (i32, i32, i32) {
    %c0_i32 = arith.constant 0 : i32
    %c0_i32_0 = arith.constant 0 : i32
    %c0_i32_1 = arith.constant 0 : i32
    return %arg1, %c0_i32, %c0_i32_0 : i32, i32, i32
  }
  func.func @transform_1(%arg0: i32, %arg1: i32) -> (i32, i32, i32) {
    %c0_i32 = arith.constant 0 : i32
    %c0_i32_0 = arith.constant 0 : i32
    %c0_i32_1 = arith.constant 0 : i32
    return %arg1, %c0_i32, %c0_i32_0 : i32, i32, i32
  }
  func.func @transform_2(%arg0: i32, %arg1: i32) -> (i32, i32) {
    %c0_i32 = arith.constant 0 : i32
    %c0_i32_0 = arith.constant 0 : i32
    return %c0_i32, %arg0 : i32, i32
  }
  func.func @transform_3(%arg0: i32, %arg1: i32) -> (i32, i32) {
    %c0_i32 = arith.constant 0 : i32
    %c0_i32_0 = arith.constant 0 : i32
    return %c0_i32, %arg0 : i32, i32
  }
  func.func @transform_4(%arg0: i32, %arg1: i32) -> (i32, i32, i32) {
    %c0_i32 = arith.constant 0 : i32
    %c0_i32_0 = arith.constant 0 : i32
    return %arg1, %c0_i32, %arg0 : i32, i32, i32
  }
}

</mosaic_0001>

<llo_original>
// kernel: tpu_custom_call.1
$region0: #{tpu_custom_call.1}
  #allocation0 [shape = 'u32[]', space=smem, size = 0x4, offset = 0x4, fixed_abs, tag = 'smem constant byte address 0x4 - core index']
  #allocation1 [shape = 'u32[144,128]{1,0:T(1,128)}', space=vmem, size = 0x12000, scoped, tag = 'internal scratch']
  %s0 = inlined_call_operand.vmem [shape: f32[4,8,4], index: 0, kind: input, shape index: {}]
  %s1 = inlined_call_operand.vmem [shape: f32[4,8,4], index: 1, kind: input, shape index: {}]
  %s2 = inlined_call_operand.vmem [shape: bf16[8,32], index: 2, kind: input, shape index: {}]
  %s3 = inlined_call_operand.vmem [shape: f32[1,32], index: 3, kind: input, shape index: {}]
  %s4 = inlined_call_operand.hbm [shape: f32[4,8,32], index: 4, kind: output, shape index: {}]
  %s5 = sld [smem:[#allocation0]]
  $region49: #{tpu_custom_call.1} parent=0
    _
  %s7 = ssub.s32 1, %s5
  %s8 = scalar_select 0, %s7, %s5
  $region1: #{tpu_custom_call.1} parent=0
    #allocation2 [shape = 'u8[16384]{0}', space=vmem, size = 0x4000, scoped, tag = 'output window, operand 0']
    #allocation3 [shape = 's32[2]{0}', space=sflag, size = 0x8, scoped, tag = 'scoped memory for tpu_custom_call.1']
    %9 = vsyncpa [#allocation3], 0
    %s10 = scalar_lea.sflag [#allocation3], 1
    %11 = vsyncpa %s10, 0
    loop: start=0, step=1, limit=4
    $region2: #{tpu_custom_call.1} parent=1 // loop_pre_header
      _
    $region3: #{tpu_custom_call.1} parent=1 // loop_header
      %s13 = sphi 0, %s17
      %p14 = scmp.ge.s32.totalorder %s13, 4
      %s20 = sphi 0, %s32
      %s21 = sphi 0, %s28
      %s22 = sphi 0, %s20
      %s23 = sphi 0, %s21
      %s24 = sphi 0, %s22
      %s25 = sphi 0, %s23
      %s35 = sphi 0, %s37
      %s38 = sphi 0, %s35
      %s39 = sphi 0, %s38
      %s55 = sphi 0, %s39
      %s61 = sphi 0, %s63
      %s64 = sphi 0, %s61
      %s65 = sphi 0, %s64
      %s81 = sphi 0, %s65
      %s87 = sphi 0, %s89
      %s90 = sphi 0, %s87
      %s91 = sphi 0, %s90
      %s107 = sphi 0, %s91
      %s113 = sphi 0, %s115
      %s116 = sphi 0, %s113
      %s117 = sphi 0, %s116
      %s133 = sphi 0, %s117
      %s141 = sphi 0, %s143
      %s144 = sphi 0, %s141
      %s145 = sphi 0, %s144
      %s161 = sphi 0, %s145
    $region4: #{tpu_custom_call.1} parent=1 // loop_header_branch
      %16 = sbr.rel (%p14) target = $region8
    $region5: #{tpu_custom_call.1} parent=1 // loop_body
      %s18 = ssub.s32 %s13, 1
      %s19 = ssub.s32 %s13, 2
      %s26 = sadd.s32 1, %s21
      %p27 = scmp.ge.s32.totalorder %s26, 2
      %s28 = scalar_select %p27, 0, %s26
      %s29 = sadd.s32 1, %s20
      %s30 = scalar_select %p27, %s29, %s20
      %p31 = scmp.ge.s32.totalorder %s30, 1
      %s32 = scalar_select %p31, 0, %s30
      %s33 = ssub.s32 %s21, %s28
      %p34 = scmp.eq.s32.totalorder %s33, 0
      %s36 = sadd.s32 %s35, 1
      %s37 = scalar_select %p34, %s35, %s36
      %p40 = pneg %p34
      %p41 = scmp.eq.s32.totalorder %s13, 1
      %p42 = por %p40, %p41
      %p43 = scmp.ne.s32.totalorder %s35, %s38
      %p44 = scmp.eq.s32.totalorder %s13, 0
      %p45 = por %p43, %p44
      %p46 = scmp.ne.s32.totalorder %s35, %s38
      %p47 = scmp.eq.s32.totalorder %s18, 1
      %p48 = por %p46, %p47
      %p49 = scmp.ne.s32.totalorder %s38, %s39
      %p50 = scmp.eq.s32.totalorder %s18, 0
      %p51 = por %p49, %p50
      %p52 = scmp.ne.s32.totalorder %s38, %s39
      %p53 = scmp.eq.s32.totalorder %s19, 1
      %p54 = por %p52, %p53
      %p56 = scmp.ne.s32.totalorder %s39, %s55
      %p57 = scmp.eq.s32.totalorder %s19, 0
      %p58 = por %p56, %p57
      %s59 = ssub.s32 %s21, %s28
      %p60 = scmp.eq.s32.totalorder %s59, 0
      %s62 = sadd.s32 %s61, 1
      %s63 = scalar_select %p60, %s61, %s62
      %p66 = pneg %p60
      %p67 = scmp.eq.s32.totalorder %s13, 1
      %p68 = por %p66, %p67
      %p69 = scmp.ne.s32.totalorder %s61, %s64
      %p70 = scmp.eq.s32.totalorder %s13, 0
      %p71 = por %p69, %p70
      %p72 = scmp.ne.s32.totalorder %s61, %s64
      %p73 = scmp.eq.s32.totalorder %s18, 1
      %p74 = por %p72, %p73
      %p75 = scmp.ne.s32.totalorder %s64, %s65
      %p76 = scmp.eq.s32.totalorder %s18, 0
      %p77 = por %p75, %p76
      %p78 = scmp.ne.s32.totalorder %s64, %s65
      %p79 = scmp.eq.s32.totalorder %s19, 1
      %p80 = por %p78, %p79
      %p82 = scmp.ne.s32.totalorder %s65, %s81
      %p83 = scmp.eq.s32.totalorder %s19, 0
      %p84 = por %p82, %p83
      %s85 = ssub.s32 %s20, %s32
      %p86 = scmp.eq.s32.totalorder %s85, 0
      %s88 = sadd.s32 %s87, 1
      %s89 = scalar_select %p86, %s87, %s88
      %p92 = pneg %p86
      %p93 = scmp.eq.s32.totalorder %s13, 1
      %p94 = por %p92, %p93
      %p95 = scmp.ne.s32.totalorder %s87, %s90
      %p96 = scmp.eq.s32.totalorder %s13, 0
      %p97 = por %p95, %p96
      %p98 = scmp.ne.s32.totalorder %s87, %s90
      %p99 = scmp.eq.s32.totalorder %s18, 1
      %p100 = por %p98, %p99
      %p101 = scmp.ne.s32.totalorder %s90, %s91
      %p102 = scmp.eq.s32.totalorder %s18, 0
      %p103 = por %p101, %p102
      %p104 = scmp.ne.s32.totalorder %s90, %s91
      %p105 = scmp.eq.s32.totalorder %s19, 1
      %p106 = por %p104, %p105
      %p108 = scmp.ne.s32.totalorder %s91, %s107
      %p109 = scmp.eq.s32.totalorder %s19, 0
      %p110 = por %p108, %p109
      %s111 = ssub.s32 %s20, %s32
      %p112 = scmp.eq.s32.totalorder %s111, 0
      %s114 = sadd.s32 %s113, 1
      %s115 = scalar_select %p112, %s113, %s114
      %p118 = pneg %p112
      %p119 = scmp.eq.s32.totalorder %s13, 1
      %p120 = por %p118, %p119
      %p121 = scmp.ne.s32.totalorder %s113, %s116
      %p122 = scmp.eq.s32.totalorder %s13, 0
      %p123 = por %p121, %p122
      %p124 = scmp.ne.s32.totalorder %s113, %s116
      %p125 = scmp.eq.s32.totalorder %s18, 1
      %p126 = por %p124, %p125
      %p127 = scmp.ne.s32.totalorder %s116, %s117
      %p128 = scmp.eq.s32.totalorder %s18, 0
      %p129 = por %p127, %p128
      %p130 = scmp.ne.s32.totalorder %s116, %s117
      %p131 = scmp.eq.s32.totalorder %s19, 1
      %p132 = por %p130, %p131
      %p134 = scmp.ne.s32.totalorder %s117, %s133
      %p135 = scmp.eq.s32.totalorder %s19, 0
      %p136 = por %p134, %p135
      %s137 = ssub.s32 %s21, %s28
      %s138 = ssub.s32 %s20, %s32
      %s139 = sor.u32 %s137, %s138
      %p140 = scmp.eq.s32.totalorder %s139, 0
      %s142 = sadd.s32 %s141, 1
      %s143 = scalar_select %p140, %s141, %s142
      %p146 = pneg %p140
      %p147 = scmp.eq.s32.totalorder %s13, 1
      %p148 = por %p146, %p147
      %p149 = scmp.ne.s32.totalorder %s141, %s144
      %p150 = scmp.eq.s32.totalorder %s13, 0
      %p151 = por %p149, %p150
      %p152 = scmp.ne.s32.totalorder %s141, %s144
      %p153 = scmp.eq.s32.totalorder %s18, 1
      %p154 = por %p152, %p153
      %p155 = scmp.ne.s32.totalorder %s144, %s145
      %p156 = scmp.eq.s32.totalorder %s18, 0
      %p157 = por %p155, %p156
      %p158 = scmp.ne.s32.totalorder %s144, %s145
      %p159 = scmp.eq.s32.totalorder %s19, 1
      %p160 = por %p158, %p159
      %p162 = scmp.ne.s32.totalorder %s145, %s161
      %p163 = scmp.eq.s32.totalorder %s19, 0
      %p164 = por %p162, %p163
      %p165 = scmp.le.s32.totalorder 1, %s13
      %p166 = scmp.lt.s32.totalorder %s13, 3
      %p167 = pnand %p165, %p166
      %p168 = pneg %p167
      // Predicated region
      $region9: #{tpu_custom_call.1} parent=5 // pred_check
        _
      $region10: #{tpu_custom_call.1} parent=5 // pred_check_branch
        %170 = sbr.rel (%p167) target = $region12
      $region11: #{tpu_custom_call.1} parent=5 // pred_region
        %s171 = ssub.s32 %s13, 1
        // Predicated region
        $region13: #{tpu_custom_call.1} parent=11 // pred_check
          %p172 = pneg %p103
        $region14: #{tpu_custom_call.1} parent=11 // pred_check_branch
          %174 = sbr.rel (%p172) target = $region16
        $region15: #{tpu_custom_call.1} parent=11 // pred_region
          %p175 = scmp.lt.s32.totalorder %s22, 0
          %s176 = scalar_select %p175, %s22, 0
          %s177 = smul.addr %s176, 4
          %s178 = scalar_lea.vmem %s2, %s177
        $region16: #{tpu_custom_call.1} parent=11 // pred_fallthru
          _
        // Predicated region
        $region17: #{tpu_custom_call.1} parent=11 // pred_check
          %p179 = pneg %p129
        $region18: #{tpu_custom_call.1} parent=11 // pred_check_branch
          %181 = sbr.rel (%p179) target = $region20
        $region19: #{tpu_custom_call.1} parent=11 // pred_region
          %p182 = scmp.lt.s32.totalorder %s22, 0
          %s183 = scalar_select %p182, %s22, 0
          %s184 = scalar_lea.vmem %s3, %s183
        $region20: #{tpu_custom_call.1} parent=11 // pred_fallthru
          _
      $region12: #{tpu_custom_call.1} parent=5 // pred_fallthru
        _
      %p185 = scmp.lt.s32.totalorder %s13, 2
      // Predicated region
      $region21: #{tpu_custom_call.1} parent=5 // pred_check
        %p186 = pneg %p185
      $region22: #{tpu_custom_call.1} parent=5 // pred_check_branch
        %188 = sbr.rel (%p186) target = $region24
      $region23: #{tpu_custom_call.1} parent=5 // pred_region
        // Predicated region
        $region25: #{tpu_custom_call.1} parent=23 // pred_check
          %p189 = pneg %p45
        $region26: #{tpu_custom_call.1} parent=23 // pred_check_branch
          %191 = sbr.rel (%p189) target = $region28
        $region27: #{tpu_custom_call.1} parent=23 // pred_region
          %s192 = smul.u32 2, %s21
          %p193 = scmp.lt.s32.totalorder %s192, 3
          %s194 = scalar_select %p193, %s192, 3
          %s195 = smul.addr %s194, 8
          %s196 = scalar_lea.vmem %s0, %s195
          %s197 = smul.u32 2, %s21
        $region28: #{tpu_custom_call.1} parent=23 // pred_fallthru
          _
        // Predicated region
        $region29: #{tpu_custom_call.1} parent=23 // pred_check
          %p198 = pneg %p71
        $region30: #{tpu_custom_call.1} parent=23 // pred_check_branch
          %200 = sbr.rel (%p198) target = $region32
        $region31: #{tpu_custom_call.1} parent=23 // pred_region
          %s201 = smul.u32 2, %s21
          %p202 = scmp.lt.s32.totalorder %s201, 3
          %s203 = scalar_select %p202, %s201, 3
          %s204 = smul.addr %s203, 8
          %s205 = scalar_lea.vmem %s1, %s204
          %s206 = smul.u32 2, %s21
        $region32: #{tpu_custom_call.1} parent=23 // pred_fallthru
          _
      $region24: #{tpu_custom_call.1} parent=5 // pred_fallthru
        _
      %p207 = scmp.le.s32.totalorder 1, %s13
      %p208 = scmp.lt.s32.totalorder %s13, 3
      %p209 = pnand %p207, %p208
      %p210 = pneg %p209
      // Predicated region
      $region33: #{tpu_custom_call.1} parent=5 // pred_check
        _
      $region34: #{tpu_custom_call.1} parent=5 // pred_check_branch
        %212 = sbr.rel (%p209) target = $region36
      $region35: #{tpu_custom_call.1} parent=5 // pred_region
        %s213 = ssub.s32 %s13, 1
        %s214 = smul.u32 2, %s23
        %p215 = scmp.lt.s32.totalorder %s214, 3
        %s216 = scalar_select %p215, %s214, 3
        %s217 = smul.addr %s216, 8
        %s218 = scalar_lea.vmem %s0, %s217
        %p219 = pneg %p51
        %p220 = pneg %p48
        %s221 = smul.u32 2, %s23
        %p222 = scmp.lt.s32.totalorder %s221, 3
        %s223 = scalar_select %p222, %s221, 3
        %s224 = smul.addr %s223, 8
        %s225 = scalar_lea.vmem %s1, %s224
        %p226 = pneg %p77
        %p227 = pneg %p74
        %p228 = scmp.lt.s32.totalorder %s22, 0
        %s229 = scalar_select %p228, %s22, 0
        %s230 = smul.addr %s229, 4
        %s231 = scalar_lea.vmem %s2, %s230
        %p232 = pneg %p103
        %p233 = pneg %p100
        %p234 = scmp.lt.s32.totalorder %s22, 0
        %s235 = scalar_select %p234, %s22, 0
        %s236 = scalar_lea.vmem %s3, %s235
        %p237 = pneg %p129
        %p238 = pneg %p126
        %p239 = pneg %p157
        %p240 = pneg %p154
        %s241 = sand.u32 %s144, 1
        %s242 = scalar_lea.sflag [#allocation3], %s241
        %s243 = sand.u32 %s144, 1
        %s244 = smul.addr %s243, 16
        %s245 = scalar_lea.vmem [#allocation2], %s244
        %s246 = smul.u32 2, %s23
        %p247 = scmp.lt.s32.totalorder %s246, 3
        %s248 = scalar_select %p247, %s246, 3
        %s249 = smul.addr %s248, 8
        %s250 = scalar_lea.vmem %s0, %s249
        %s251 = smul.u32 2, %s23
        %s252 = smul.u32 2, %s23
        %p253 = scmp.lt.s32.totalorder %s252, 3
        %s254 = scalar_select %p253, %s252, 3
        %s255 = smul.addr %s254, 8
        %s256 = scalar_lea.vmem %s1, %s255
        %s257 = smul.u32 2, %s23
        %p258 = scmp.lt.s32.totalorder %s22, 0
        %s259 = scalar_select %p258, %s22, 0
        %s260 = smul.addr %s259, 4
        %s261 = scalar_lea.vmem %s2, %s260
        %p262 = scmp.lt.s32.totalorder %s22, 0
        %s263 = scalar_select %p262, %s22, 0
        %s264 = scalar_lea.vmem %s3, %s263
        %s265 = smul.u32 2, %s23
        %v267 = vld [vmem:[%s261] sm:$0xf]
        %v268 = vld [vmem:[%s264] sm:$0x1]
        %v269 = vld [vmem:[%s250] sm:$0xff]
        %v270 = vld [vmem:[%s256] sm:$0xff]
        %272 = vrot.lane.b32.xlu0 %v270, 4
        %v273 = vpop.permute.xlu0 %272
        %vm275 = vcmask 31744
        %v276 = vsel %vm275, %v269, %v273
        %v277 = vpack.c.bf16 %v276, %v276
        %v279 = vlaneseq
        %v280 = vshrl.u32 %v279, 7
        %v281 = vsub.s32 0, %v280
        %v282 = vrot.slane %v268, %v281
        %284 = vxpose.xlu0.c.b16.start [1/8] %v277, 128
        %285 = vxpose.xlu0.c.b16.cont [2/8] 0, 128
        %286 = vxpose.xlu0.c.b16.cont [3/8] 0, 128
        %287 = vxpose.xlu0.c.b16.cont [4/8] 0, 128
        %288 = vxpose.xlu0.c.b16.cont [5/8] 0, 128
        %289 = vxpose.xlu0.c.b16.cont [6/8] 0, 128
        %290 = vxpose.xlu0.c.b16.cont [7/8] 0, 128
        %291 = vxpose.xlu0.c.b16.end [8/8] 0, 128
        %v292 = vpop.trf.xlu0
        %v293 = vpop.trf.xlu0
        %v294 = vpop.trf.xlu0
        %v295 = vpop.trf.xlu0
        %v296 = vpop.trf.xlu0
        %v297 = vpop.trf.xlu0
        %v298 = vpop.trf.xlu0
        %v299 = vpop.trf.xlu0
        %vm300 = vcmask 64512
        %v302 = vsel %vm300, %v292, 0
        %vm304 = vcmask 1043456
        %v306 = vsel %vm304, %v267, 0
        %308 = vmatprep.subr.bf16.mxu0 0
        %309 = vmatpush1.bf16.msra.mxu0 %v306
        %310 = vmatprep.subr.bf16.mxu0 0
        %311 = vmatpush1.bf16.msra.mxu0 0
        %312 = vmatprep.subr.bf16.mxu0 0
        %313 = vmatpush1.bf16.msra.mxu0 0
        %314 = vmatprep.subr.bf16.mxu0 0
        %315 = vmatpush1.bf16.msra.mxu0 0
        %316 = vmatprep.subr.bf16.mxu0 0
        %317 = vmatpush1.bf16.msra.mxu0 0
        %318 = vmatprep.subr.bf16.mxu0 0
        %319 = vmatpush1.bf16.msra.mxu0 0
        %320 = vmatprep.subr.bf16.mxu0 0
        %321 = vmatpush1.bf16.msra.mxu0 0
        %322 = vmatprep.subr.bf16.mxu0 0
        %323 = vmatpush1.bf16.msra.mxu0 0
        %324 = vmatprep.subr.bf16.mxu0 0
        %325 = vmatpush1.bf16.msra.mxu0 0
        %326 = vmatprep.subr.bf16.mxu0 0
        %327 = vmatpush1.bf16.msra.mxu0 0
        %328 = vmatprep.subr.bf16.mxu0 0
        %329 = vmatpush1.bf16.msra.mxu0 0
        %330 = vmatprep.subr.bf16.mxu0 0
        %331 = vmatpush1.bf16.msra.mxu0 0
        %332 = vmatprep.subr.bf16.mxu0 0
        %333 = vmatpush1.bf16.msra.mxu0 0
        %334 = vmatprep.subr.bf16.mxu0 0
        %335 = vmatpush1.bf16.msra.mxu0 0
        %336 = vmatprep.subr.bf16.mxu0 0
        %337 = vmatpush1.bf16.msra.mxu0 0
        %338 = vmatprep.subr.bf16.mxu0 0
        %339 = vmatpush1.bf16.msra.mxu0 0
        %340 = vmatprep.mubr.bf16.mxu0 0
        %341 = vmatmul.mubr.bf16.gmra.mrb[0].mxu0 %v302
        %v342 = vpop.f32.mrb[0].mxu0
        %v343 = vadd.f32 %v282, %v342
        %v344 = vpop.f32.mrb[0].mxu0
        %v345 = vpop.f32.mrb[0].mxu0
        %v346 = vpop.f32.mrb[0].mxu0
        %347 = vdwg.mxu0
        %vm348 = vcmask 261120
        %349 = vst.msk [vmem:[%s245] sm:$0xff] %vm348, %v343
        %s350 = scalar_lea.vmem %s250, 8
        %v351 = vld [vmem:[%s350] sm:$0xff]
        %s352 = scalar_lea.vmem %s256, 8
        %v353 = vld [vmem:[%s352] sm:$0xff]
        %355 = vrot.lane.b32.xlu0 %v353, 4
        %v356 = vpop.permute.xlu0 %355
        %v358 = vsel %vm275, %v351, %v356
        %v359 = vpack.c.bf16 %v358, %v358
        %360 = vxpose.xlu0.c.b16.start [1/8] %v359, 128
        %361 = vxpose.xlu0.c.b16.cont [2/8] 0, 128
        %362 = vxpose.xlu0.c.b16.cont [3/8] 0, 128
        %363 = vxpose.xlu0.c.b16.cont [4/8] 0, 128
        %364 = vxpose.xlu0.c.b16.cont [5/8] 0, 128
        %365 = vxpose.xlu0.c.b16.cont [6/8] 0, 128
        %366 = vxpose.xlu0.c.b16.cont [7/8] 0, 128
        %367 = vxpose.xlu0.c.b16.end [8/8] 0, 128
        %v368 = vpop.trf.xlu0
        %v369 = vpop.trf.xlu0
        %v370 = vpop.trf.xlu0
        %v371 = vpop.trf.xlu0
        %v372 = vpop.trf.xlu0
        %v373 = vpop.trf.xlu0
        %v374 = vpop.trf.xlu0
        %v375 = vpop.trf.xlu0
        %v377 = vsel %vm300, %v368, 0
        %379 = vmatprep.subr.bf16.mxu0 0
        %380 = vmatpush1.bf16.msra.mxu0 %v306
        %381 = vmatprep.subr.bf16.mxu0 0
        %382 = vmatpush1.bf16.msra.mxu0 0
        %383 = vmatprep.subr.bf16.mxu0 0
        %384 = vmatpush1.bf16.msra.mxu0 0
        %385 = vmatprep.subr.bf16.mxu0 0
        %386 = vmatpush1.bf16.msra.mxu0 0
        %387 = vmatprep.subr.bf16.mxu0 0
        %388 = vmatpush1.bf16.msra.mxu0 0
        %389 = vmatprep.subr.bf16.mxu0 0
        %390 = vmatpush1.bf16.msra.mxu0 0
        %391 = vmatprep.subr.bf16.mxu0 0
        %392 = vmatpush1.bf16.msra.mxu0 0
        %393 = vmatprep.subr.bf16.mxu0 0
        %394 = vmatpush1.bf16.msra.mxu0 0
        %395 = vmatprep.subr.bf16.mxu0 0
        %396 = vmatpush1.bf16.msra.mxu0 0
        %397 = vmatprep.subr.bf16.mxu0 0
        %398 = vmatpush1.bf16.msra.mxu0 0
        %399 = vmatprep.subr.bf16.mxu0 0
        %400 = vmatpush1.bf16.msra.mxu0 0
        %401 = vmatprep.subr.bf16.mxu0 0
        %402 = vmatpush1.bf16.msra.mxu0 0
        %403 = vmatprep.subr.bf16.mxu0 0
        %404 = vmatpush1.bf16.msra.mxu0 0
        %405 = vmatprep.subr.bf16.mxu0 0
        %406 = vmatpush1.bf16.msra.mxu0 0
        %407 = vmatprep.subr.bf16.mxu0 0
        %408 = vmatpush1.bf16.msra.mxu0 0
        %409 = vmatprep.subr.bf16.mxu0 0
        %410 = vmatpush1.bf16.msra.mxu0 0
        %411 = vmatprep.mubr.bf16.mxu0 0
        %412 = vmatmul.mubr.bf16.gmra.mrb[0].mxu0 %v377
        %v413 = vpop.f32.mrb[0].mxu0
        %v414 = vadd.f32 %v282, %v413
        %v415 = vpop.f32.mrb[0].mxu0
        %v416 = vpop.f32.mrb[0].mxu0
        %v417 = vpop.f32.mrb[0].mxu0
        %418 = vdwg.mxu0
        %s419 = scalar_lea.vmem %s245, 8 [#allocation2]
        %420 = vst.msk [vmem:[%s419] sm:$0xff] %vm348, %v414
        %s421 = sand.u32 %s144, 1
        %s422 = scalar_lea.sflag [#allocation3], %s421
        %s423 = sand.u32 %s144, 1
        %s424 = smul.addr %s423, 16
        %s425 = scalar_lea.vmem [#allocation2], %s424
        // Predicated region
        $region37: #{tpu_custom_call.1} parent=35 // pred_check
          %p426 = pneg %p154
        $region38: #{tpu_custom_call.1} parent=35 // pred_check_branch
          %428 = sbr.rel (%p426) target = $region40
        $region39: #{tpu_custom_call.1} parent=35 // pred_region
          %s429 = smul.u32 2, %s23
          %s431 = ssub.s32 256, 256
          %432 = vsyncadd %s422, %s431
          %s433 = sadd.s32 %s22, %s429
          %s434 = smul.addr %s433, 128
          %s435 = scalar_lea.hbm %s4, %s434
          %s436 = sshll.u32 %s425, 4
          %s437 = int_to_ptr.vmem [resolvable:$true] %s436
          %442 = dma.vmem_to_hbm [thread:$0]  %s437, 256, %s435, %s422, 128, 128, 8
        $region40: #{tpu_custom_call.1} parent=35 // pred_fallthru
          _
      $region36: #{tpu_custom_call.1} parent=5 // pred_fallthru
        _
      %p443 = scmp.le.s32.totalorder 2, %s13
      // Predicated region
      $region41: #{tpu_custom_call.1} parent=5 // pred_check
        %p444 = pneg %p443
      $region42: #{tpu_custom_call.1} parent=5 // pred_check_branch
        %446 = sbr.rel (%p444) target = $region44
      $region43: #{tpu_custom_call.1} parent=5 // pred_region
        %s447 = ssub.s32 %s13, 2
        // Predicated region
        $region45: #{tpu_custom_call.1} parent=43 // pred_check
          %p448 = pneg %p160
        $region46: #{tpu_custom_call.1} parent=43 // pred_check_branch
          %450 = sbr.rel (%p448) target = $region48
        $region47: #{tpu_custom_call.1} parent=43 // pred_region
          %s451 = sand.u32 %s145, 1
          %s452 = scalar_lea.sflag [#allocation3], %s451
          %s453 = sand.u32 %s145, 1
          %s454 = smul.addr %s453, 16
          %s455 = scalar_lea.vmem [#allocation2], %s454
          %456 = dma.done %s452, 256
        $region48: #{tpu_custom_call.1} parent=43 // pred_fallthru
          _
      $region44: #{tpu_custom_call.1} parent=5 // pred_fallthru
        _
    $region6: #{tpu_custom_call.1} parent=1 // loop_footer
      %s17 = sadd.s32 1, %s13
    $region7: #{tpu_custom_call.1} parent=1 // loop_footer_branch
      %12 = sbr.rel target = $region3
    $region8: #{tpu_custom_call.1} parent=1 // loop_exit
      _
    %457 = vsyncpa [#allocation3], 1
    %s458 = scalar_lea.sflag [#allocation3], 1
    %459 = vsyncpa %s458, 1

</llo_original>
